<compile_context>
chip_gen: v7x
topology: tpu7x:2x2x1
jax: 0.10.0
libtpu: 0.0.40
codegen_flags: <defaults>
</compile_context>

<pallas_src>
import math

import jax
import jax.numpy as jnp
from jax.experimental import pallas as pl
from jax.experimental.pallas import tpu as pltpu


# ---------------------------------------------------------------------------
# Pallas kernel: per-node score = sigmoid(sigmoid(w . x + b) - negative_score)
# ---------------------------------------------------------------------------
def _score_kernel(w_ref, b_ref, x_ref, neg_ref, score_ref):
    # w_ref:     (C,)         SMEM  ChebConv K=1 weight (C -> 1), scalar reads
    # b_ref:     (1,)         SMEM  bias scalar
    # x_ref:     (C, TR, 128) VMEM  node-feature tile, nodes folded onto (sublane, lane)
    # neg_ref:   (TR, 128)    VMEM  negative_score tile
    # score_ref: (TR, 128)    VMEM  output score tile (dense -> unmasked stores)
    C = x_ref.shape[0]
    # Bias folded into the first FMA; unrolled per-channel FMA chain on dense
    # (TR, 128) vregs.  VPU only (MXU/XLU idle); the two sigmoids go to the EUP.
    acc = x_ref[0].astype(jnp.float32) * w_ref[0] + b_ref[0]
    for c in range(1, C):
        acc = acc + x_ref[c].astype(jnp.float32) * w_ref[c]
    s = jax.nn.sigmoid(acc)                   # non_linearity #1
    s = jax.nn.sigmoid(s - neg_ref[...])      # non_linearity #2
    score_ref[...] = s


def _round_up(n, m):
    return ((n + m - 1) // m) * m


def cspool_score(x, weight, bias, negative_score, *, max_lanes=32768):
    """Compute CSPool node scores with a sublane/lane-dense Pallas kernel.

    Returns the per-node score as an (N,) float32 array.
    """
    N, C = x.shape

    Np = _round_up(N, 128)           # pad only to one vreg row, never to the tile
    R = Np // 128

    # Row-tile selection: one grid step for graphs up to `max_lanes` nodes; for
    # larger graphs use max_rows-row tiles (multiple of 8) with a ragged last
    # block so grid >= 2 and both v7x TensorCores get work.
    max_rows = max(8, max_lanes // 128)      # 256 rows = 32768 lanes by default
    if R <= max_rows:
        tr = R                               # equals full dim -> (8,128) rule satisfied
        grid = 1
    else:
        tr = max_rows                        # multiple of 8; ragged last block OK
        grid = pl.cdiv(R, tr)

    pad = Np - N
    # Single fused layout expression (pad -> transpose -> reshape).  x keeps its
    # native dtype in HBM; negative_score's astype is a no-op when already f32.
    # TODO(synk): callers that keep node features resident in [C, R, 128] layout
    # upstream can skip this transpose/pad entirely.
    if pad:
        x_t = jnp.pad(x, ((0, pad), (0, 0))).T.reshape(C, R, 128)
        neg = jnp.pad(negative_score.astype(jnp.float32), (0, pad)).reshape(R, 128)
    else:
        x_t = x.T.reshape(C, R, 128)
        neg = negative_score.astype(jnp.float32).reshape(R, 128)

    w = weight.reshape(C).astype(jnp.float32)
    b = bias.reshape(1).astype(jnp.float32)

    itemsize = jnp.dtype(x.dtype).itemsize
    cost = pl.CostEstimate(
        flops=2 * Np * C + 2 * Np,
        transcendentals=2 * Np,                                   # two sigmoids / node
        bytes_accessed=Np * C * itemsize + 2 * Np * 4,            # x read + neg read + score write
    )

    score = pl.pallas_call(
        _score_kernel,
        out_shape=jax.ShapeDtypeStruct((R, 128), jnp.float32),
        grid_spec=pltpu.PrefetchScalarGridSpec(
            num_scalar_prefetch=0,
            grid=(grid,),
            in_specs=[
                pl.BlockSpec(memory_space=pltpu.MemorySpace.SMEM),   # weight (C,)
                pl.BlockSpec(memory_space=pltpu.MemorySpace.SMEM),   # bias   (1,)
                pl.BlockSpec((C, tr, 128), lambda i: (0, i, 0)),     # x tile
                pl.BlockSpec((tr, 128), lambda i: (i, 0)),           # negative_score tile
                # NOTE: if a trace ever shows the x DMA exposed for huge graphs,
                # add pipeline_mode=pl.Buffered(3) on the x BlockSpec.
            ],
            out_specs=pl.BlockSpec((tr, 128), lambda i: (i, 0)),
        ),
        compiler_params=pltpu.CompilerParams(dimension_semantics=("parallel",)),
        cost_estimate=cost,
    )(w, b, x_t, neg)
    return score.reshape(Np)[:N]


# ---------------------------------------------------------------------------
# Full CSPool forward (glue in plain JAX around the Pallas score kernel)
# ---------------------------------------------------------------------------
def cspool_forward(x, edge_index, weight, bias, ratio,
                   edge_attr=None, batch=None, negative_score=None):
    N = x.shape[0]
    if batch is None:
        batch = jnp.zeros((N,), dtype=edge_index.dtype)
    if negative_score is None:
        negative_score = jnp.zeros((N,), dtype=jnp.float32)

    score = cspool_score(x, weight, bias, negative_score)

    # topk(score, ratio, batch): single graph here (batch all zeros), so
    # k = ceil(ratio * N) and perm are the indices of the k highest scores.
    k = int(math.ceil(ratio * N))
    _, perm = jax.lax.top_k(score, k)

    # Matches the reference CSPool.forward exactly: x = x[perm] (no score gating).
    x_out = x[perm]
    batch_out = batch[perm]

    # filter_adj: remap surviving nodes to [0, k), drop edges touching removed nodes.
    # TODO(synk): PyG's filter_adj returns variable-length edge lists; with static
    # shapes we keep all E edges, mark dropped ones with -1 sentinels, and zero
    # their edge_attr.  Downstream consumers must apply edge_mask (>= 0) before
    # indexing, since negative indices wrap around in JAX.
    new_idx = jnp.full((N,), -1, dtype=edge_index.dtype)
    new_idx = new_idx.at[perm].set(jnp.arange(k, dtype=edge_index.dtype))
    row, col = edge_index[0], edge_index[1]
    new_row, new_col = new_idx[row], new_idx[col]
    edge_mask = (new_row >= 0) & (new_col >= 0)
    edge_index_out = jnp.where(edge_mask, jnp.stack([new_row, new_col]), -1)

    if edge_attr is not None:
        m = edge_mask[:, None] if edge_attr.ndim > 1 else edge_mask
        edge_attr_out = jnp.where(m, edge_attr, 0)
    else:
        edge_attr_out = None

    return x_out, edge_index_out, edge_attr_out, batch_out, perm, score


# ---------------------------------------------------------------------------
# Demo
# ---------------------------------------------------------------------------
if __name__ == "__main__":
    key = jax.random.PRNGKey(0)
    k_x, k_e, k_w, k_n = jax.random.split(key, 4)

    N, C, E = 16, 4, 24          # nodes, in_channels, edges
    ratio = 0.5

    x = jax.random.normal(k_x, (N, C), dtype=jnp.float32)
    edge_index = jax.random.randint(k_e, (2, E), 0, N, dtype=jnp.int32)
    negative_score = jax.random.uniform(k_n, (N,), dtype=jnp.float32)

    # Deterministic parameter init for ChebConv(in_channels, 1, K=1):
    # a single (C,) weight vector and scalar bias.
    weight = jax.random.normal(k_w, (C,), dtype=jnp.float32) * (1.0 / math.sqrt(C))
    bias = jnp.zeros((1,), dtype=jnp.float32)

    out = cspool_forward(x, edge_index, weight, bias, ratio,
                         negative_score=negative_score)
    out = jax.block_until_ready(out)
    x_out, edge_index_out, edge_attr_out, batch_out, perm, score = out

    # Reference check of the full score path (including the neg-subtraction branch).
    s1 = jax.nn.sigmoid(x @ weight.reshape(C, 1) + bias).reshape(N)
    score_ref = jax.nn.sigmoid(s1 - negative_score)
    assert jnp.allclose(score, score_ref, atol=1e-5), "score mismatch"

    k = int(math.ceil(ratio * N))
    assert x_out.shape == (k, C)
    assert edge_index_out.shape == (2, E)
    assert batch_out.shape == (k,)
    assert jnp.allclose(x_out, x[perm]), "x_out gather mismatch"

    # Secondary check: larger graph with lane padding (single dense grid step).
    N2 = 2500
    k2_x, k2_n = jax.random.split(jax.random.PRNGKey(1), 2)
    x2 = jax.random.normal(k2_x, (N2, C), dtype=jnp.float32)
    neg2 = jax.random.uniform(k2_n, (N2,), dtype=jnp.float32)
    score2_ref = jax.nn.sigmoid(
        jax.nn.sigmoid(x2 @ weight.reshape(C, 1) + bias).reshape(N2) - neg2)

    score2 = jax.block_until_ready(cspool_score(x2, weight, bias, neg2))
    assert jnp.allclose(score2, score2_ref, atol=1e-5), "large-graph score mismatch"

    # Tertiary check: force the multi-tile grid path with a ragged last block.
    score2b = jax.block_until_ready(
        cspool_score(x2, weight, bias, neg2, max_lanes=1024))
    assert jnp.allclose(score2b, score2_ref, atol=1e-5), "tiled/ragged score mismatch"

    print("KERNEL_OK")
</pallas_src>

<mosaic_0001>
module attributes {stable_mosaic.version = 11 : i64} {
  func.func @_score_kernel(%arg0: i32, %arg1: memref<4xf32, #tpu.memory_space<smem>>, %arg2: memref<1xf32, #tpu.memory_space<smem>>, %arg3: memref<4x1x128xf32, #tpu.memory_space<vmem>>, %arg4: memref<1x128xf32, #tpu.memory_space<vmem>>, %arg5: memref<1x128xf32, #tpu.memory_space<vmem>>) attributes {dimension_semantics = [#tpu.dimension_semantics<parallel>], iteration_bounds = array<i64: 1>, scalar_prefetch = 0 : i64, scratch_operands = 0 : i64, tpu.core_type = #tpu.core_type<tc>, window_params = [{transform_indices = @transform_0, window_bounds = array<i64: 4>}, {transform_indices = @transform_1, window_bounds = array<i64: 1>}, {transform_indices = @transform_2, window_bounds = array<i64: 4, 1, 128>}, {transform_indices = @transform_3, window_bounds = array<i64: 1, 128>}, {transform_indices = @transform_4, window_bounds = array<i64: 1, 128>}]} {
    %c0 = arith.constant 0 : index
    %c0_0 = arith.constant 0 : index
    %c0_1 = arith.constant 0 : index
    %0 = vector.load %arg3[%c0, %c0_0, %c0_1] : memref<4x1x128xf32, #tpu.memory_space<vmem>>, vector<1x1x128xf32>
    %1 = vector.shape_cast %0 : vector<1x1x128xf32> to vector<1x128xf32>
    %c0_2 = arith.constant 0 : index
    %2 = memref.load %arg1[%c0_2] : memref<4xf32, #tpu.memory_space<smem>>
    %3 = vector.broadcast %2 : f32 to vector<1x128xf32>
    %4 = arith.mulf %1, %3 : vector<1x128xf32>
    %c0_3 = arith.constant 0 : index
    %5 = memref.load %arg2[%c0_3] : memref<1xf32, #tpu.memory_space<smem>>
    %6 = vector.broadcast %5 : f32 to vector<1x128xf32>
    %7 = arith.addf %4, %6 : vector<1x128xf32>
    %c1 = arith.constant 1 : index
    %c0_4 = arith.constant 0 : index
    %c0_5 = arith.constant 0 : index
    %8 = vector.load %arg3[%c1, %c0_4, %c0_5] : memref<4x1x128xf32, #tpu.memory_space<vmem>>, vector<1x1x128xf32>
    %9 = vector.shape_cast %8 : vector<1x1x128xf32> to vector<1x128xf32>
    %c1_6 = arith.constant 1 : index
    %10 = memref.load %arg1[%c1_6] : memref<4xf32, #tpu.memory_space<smem>>
    %11 = vector.broadcast %10 : f32 to vector<1x128xf32>
    %12 = arith.mulf %9, %11 : vector<1x128xf32>
    %13 = arith.addf %7, %12 : vector<1x128xf32>
    %c2 = arith.constant 2 : index
    %c0_7 = arith.constant 0 : index
    %c0_8 = arith.constant 0 : index
    %14 = vector.load %arg3[%c2, %c0_7, %c0_8] : memref<4x1x128xf32, #tpu.memory_space<vmem>>, vector<1x1x128xf32>
    %15 = vector.shape_cast %14 : vector<1x1x128xf32> to vector<1x128xf32>
    %c2_9 = arith.constant 2 : index
    %16 = memref.load %arg1[%c2_9] : memref<4xf32, #tpu.memory_space<smem>>
    %17 = vector.broadcast %16 : f32 to vector<1x128xf32>
    %18 = arith.mulf %15, %17 : vector<1x128xf32>
    %19 = arith.addf %13, %18 : vector<1x128xf32>
    %c3 = arith.constant 3 : index
    %c0_10 = arith.constant 0 : index
    %c0_11 = arith.constant 0 : index
    %20 = vector.load %arg3[%c3, %c0_10, %c0_11] : memref<4x1x128xf32, #tpu.memory_space<vmem>>, vector<1x1x128xf32>
    %21 = vector.shape_cast %20 : vector<1x1x128xf32> to vector<1x128xf32>
    %c3_12 = arith.constant 3 : index
    %22 = memref.load %arg1[%c3_12] : memref<4xf32, #tpu.memory_space<smem>>
    %23 = vector.broadcast %22 : f32 to vector<1x128xf32>
    %24 = arith.mulf %21, %23 : vector<1x128xf32>
    %25 = arith.addf %19, %24 : vector<1x128xf32>
    %26 = arith.negf %25 : vector<1x128xf32>
    %27 = math.exp %26 : vector<1x128xf32>
    %cst = arith.constant 1.000000e+00 : f32
    %28 = vector.broadcast %cst : f32 to vector<1x128xf32>
    %29 = arith.addf %28, %27 : vector<1x128xf32>
    %30 = arith.divf %28, %29 : vector<1x128xf32>
    %c0_13 = arith.constant 0 : index
    %c0_14 = arith.constant 0 : index
    %31 = vector.load %arg4[%c0_13, %c0_14] : memref<1x128xf32, #tpu.memory_space<vmem>>, vector<1x128xf32>
    %32 = arith.subf %30, %31 : vector<1x128xf32>
    %33 = arith.negf %32 : vector<1x128xf32>
    %34 = math.exp %33 : vector<1x128xf32>
    %cst_15 = arith.constant 1.000000e+00 : f32
    %35 = vector.broadcast %cst_15 : f32 to vector<1x128xf32>
    %36 = arith.addf %35, %34 : vector<1x128xf32>
    %37 = arith.divf %35, %36 : vector<1x128xf32>
    %c0_16 = arith.constant 0 : index
    %c0_17 = arith.constant 0 : index
    %38 = vector.load %arg5[%c0_16, %c0_17] : memref<1x128xf32, #tpu.memory_space<vmem>>, vector<1x128xf32>
    tpu.vector_store %arg5[%c0_16, %c0_17], %37 {strides = array<i32>} : memref<1x128xf32, #tpu.memory_space<vmem>>, vector<1x128xf32>,
    return
  }
  func.func @transform_0(%arg0: i32) -> i32 {
    %c0_i32 = arith.constant 0 : i32
    %c0_i32_0 = arith.constant 0 : i32
    return %c0_i32 : i32
  }
  func.func @transform_1(%arg0: i32) -> i32 {
    %c0_i32 = arith.constant 0 : i32
    %c0_i32_0 = arith.constant 0 : i32
    return %c0_i32 : i32
  }
  func.func @transform_2(%arg0: i32) -> (i32, i32, i32) {
    %c0_i32 = arith.constant 0 : i32
    %c0_i32_0 = arith.constant 0 : i32
    %c0_i32_1 = arith.constant 0 : i32
    return %c0_i32, %arg0, %c0_i32_0 : i32, i32, i32
  }
  func.func @transform_3(%arg0: i32) -> (i32, i32) {
    %c0_i32 = arith.constant 0 : i32
    %c0_i32_0 = arith.constant 0 : i32
    return %arg0, %c0_i32 : i32, i32
  }
  func.func @transform_4(%arg0: i32) -> (i32, i32) {
    %c0_i32 = arith.constant 0 : i32
    %c0_i32_0 = arith.constant 0 : i32
    return %arg0, %c0_i32 : i32, i32
  }
}

</mosaic_0001>

<llo_original>
// kernel: tpu_custom_call.1
$region0: #{tpu_custom_call.1}
  #allocation0 [shape = 'u32[]', space=smem, size = 0x4, offset = 0x4, fixed_abs, tag = 'smem constant byte address 0x4 - core index']
  #allocation1 [shape = 'u32[144,128]{1,0:T(1,128)}', space=vmem, size = 0x12000, scoped, tag = 'internal scratch']
  #allocation2 [shape = 'f32[1]{0:T(128)S(6)}', space=smem, size = 0x200, scoped, tag = 'scoped memory for tpu_custom_call.1']
  %s0 = inlined_call_operand.vmem [shape: f32[4], index: 0, kind: input, shape index: {}]
  %s1 = inlined_call_operand.<no memory space> [shape: f32[1], index: 1, kind: input, shape index: {}]
  %s2 = inlined_call_operand.vmem [shape: f32[4,1,128], index: 2, kind: input, shape index: {}]
  %s3 = inlined_call_operand.vmem [shape: f32[1,128], index: 3, kind: input, shape index: {}]
  %s4 = inlined_call_operand.hbm [shape: f32[1,128], index: 4, kind: output, shape index: {}]
  %s5 = sld [smem:[#allocation0]]
  $region30: #{tpu_custom_call.1} parent=0
    _
  %s7 = ssub.s32 1, %s5
  %s8 = scalar_select 0, %s7, %s5
  %9 = sst [smem:[#allocation2]] %s1
  $region1: #{tpu_custom_call.1} parent=0
    #allocation3 [shape = 'u8[512]{0}', space=smem, size = 0x200, scoped, tag = 'input window, operand 0, single buffered']
    #allocation4 [shape = 's32[1]{0}', space=sflag, size = 0x4, scoped, tag = 'scoped memory for tpu_custom_call.1']
    #allocation5 [shape = 's32[1]{0}', space=sflag, size = 0x4, scoped, tag = 'scoped memory for tpu_custom_call.1']
    #allocation6 [shape = 'u8[512]{0}', space=vmem, size = 0x400, scoped, tag = 'output window, operand 0, single buffered']
    %10 = vsyncpa [#allocation5], 0
    %11 = vsyncpa [#allocation4], 0
    // Predicated region
    $region2: #{tpu_custom_call.1} parent=1 // pred_check
      _
    $region3: #{tpu_custom_call.1} parent=1 // pred_check_branch
      %13 = sbr.rel (0) target = $region5
    $region4: #{tpu_custom_call.1} parent=1 // pred_region
      %s15 = ssub.s32 16, 16
      %16 = vsyncadd [#allocation5], %s15
      %s18 = sshll.u32 %s0, 4
      %s19 = int_to_ptr.vmem [resolvable:$true] %s18
      %21 = dma.vmem_to_smem %s19, 16, [#allocation3], [#allocation5]
    $region5: #{tpu_custom_call.1} parent=1 // pred_fallthru
      _
    // Predicated region
    $region6: #{tpu_custom_call.1} parent=1 // pred_check
      _
    $region7: #{tpu_custom_call.1} parent=1 // pred_check_branch
      %23 = sbr.rel (0) target = $region9
    $region8: #{tpu_custom_call.1} parent=1 // pred_region
      _
    $region9: #{tpu_custom_call.1} parent=1 // pred_fallthru
      _
    // Predicated region
    $region10: #{tpu_custom_call.1} parent=1 // pred_check
      _
    $region11: #{tpu_custom_call.1} parent=1 // pred_check_branch
      %25 = sbr.rel (0) target = $region13
    $region12: #{tpu_custom_call.1} parent=1 // pred_region
      _
    $region13: #{tpu_custom_call.1} parent=1 // pred_fallthru
      _
    // Predicated region
    $region14: #{tpu_custom_call.1} parent=1 // pred_check
      _
    $region15: #{tpu_custom_call.1} parent=1 // pred_check_branch
      %27 = sbr.rel (0) target = $region17
    $region16: #{tpu_custom_call.1} parent=1 // pred_region
      _
    $region17: #{tpu_custom_call.1} parent=1 // pred_fallthru
      _
    // Predicated region
    $region18: #{tpu_custom_call.1} parent=1 // pred_check
      _
    $region19: #{tpu_custom_call.1} parent=1 // pred_check_branch
      %29 = sbr.rel (0) target = $region21
    $region20: #{tpu_custom_call.1} parent=1 // pred_region
      %30 = dma.done [#allocation5], 16
    $region21: #{tpu_custom_call.1} parent=1 // pred_fallthru
      _
    %31 = sfence
    %v32 = vld [vmem:[%s2] sm:$0x1]
    %s33 = sld [smem:[#allocation3]]
    %v34 = vstv %s33
    %v35 = vmul.f32 %v32, %v34
    %s36 = sld [smem:[#allocation2]]
    %v37 = vstv %s36
    %v38 = vadd.f32 %v35, %v37
    %s39 = scalar_lea.vmem %s2, 1
    %v40 = vld [vmem:[%s39] sm:$0x1]
    %s41 = sld [smem:[#allocation3 + $0x1]]
    %v42 = vstv %s41
    %v43 = vmul.f32 %v40, %v42
    %v44 = vadd.f32 %v38, %v43
    %s45 = scalar_lea.vmem %s2, 2
    %v46 = vld [vmem:[%s45] sm:$0x1]
    %s47 = sld [smem:[#allocation3 + $0x2]]
    %v48 = vstv %s47
    %v49 = vmul.f32 %v46, %v48
    %v50 = vadd.f32 %v44, %v49
    %s51 = scalar_lea.vmem %s2, 3
    %v52 = vld [vmem:[%s51] sm:$0x1]
    %s53 = sld [smem:[#allocation3 + $0x3]]
    %v54 = vstv %s53
    %v55 = vmul.f32 %v52, %v54
    %v56 = vadd.f32 %v50, %v55
    %v57 = vxor.u32 %v56, 2147483648
    %v58 = vmul.f32 %v57, 1.442695
    %v59 = vpow.pop %v58
    %v60 = vadd.f32 %v59, 1.0
    %v61 = vrcp.pop %v60
    %v62 = vmul.f32 1.0, %v61
    %v63 = vld [vmem:[%s3] sm:$0x1]
    %v64 = vsub.f32 %v62, %v63
    %v65 = vxor.u32 %v64, 2147483648
    %v66 = vmul.f32 %v65, 1.442695
    %v67 = vpow.pop %v66
    %v68 = vadd.f32 %v67, 1.0
    %v69 = vrcp.pop %v68
    %v70 = vmul.f32 1.0, %v69
    %71 = vst [vmem:[#allocation6] sm:$0x1] %v70
    // Predicated region
    $region22: #{tpu_custom_call.1} parent=1 // pred_check
      _
    $region23: #{tpu_custom_call.1} parent=1 // pred_check_branch
      %73 = sbr.rel (0) target = $region25
    $region24: #{tpu_custom_call.1} parent=1 // pred_region
      %s75 = ssub.s32 16, 16
      %76 = vsyncadd [#allocation4], %s75
      %s78 = sshll.u32 [#allocation6], 4
      %s79 = int_to_ptr.vmem [resolvable:$true] %s78
      %81 = dma.vmem_to_hbm [thread:$0]  %s79, 16, %s4, [#allocation4]
    $region25: #{tpu_custom_call.1} parent=1 // pred_fallthru
      _
    // Predicated region
    $region26: #{tpu_custom_call.1} parent=1 // pred_check
      _
    $region27: #{tpu_custom_call.1} parent=1 // pred_check_branch
      %83 = sbr.rel (0) target = $region29
    $region28: #{tpu_custom_call.1} parent=1 // pred_region
      %84 = dma.done [#allocation4], 16
    $region29: #{tpu_custom_call.1} parent=1 // pred_fallthru
      _
    %85 = vsyncpa [#allocation4], 1
    %86 = vsyncpa [#allocation5], 1

</llo_original>
